<compile_context>
chip_gen: v6e
topology: v6e:2x2x1
jax: 0.10.0
libtpu: 0.0.40
codegen_flags: <defaults>
</compile_context>

<pallas_src>
import functools

import jax
import jax.numpy as jnp
from jax.experimental import pallas as pl
from jax.experimental.pallas import tpu as pltpu

LANE = 128
SUBLANE = 8

# VMEM request cap: safe on every generation (v7x has only 64 MiB per TC).
# TODO(synk): raise the cap to ~100 MiB on v5e/v6e (128 MiB physical) for very large Hp/TB.
_VMEM_CAP_BYTES = 56 << 20
_VMEM_FLOOR_BYTES = 32 << 20
_VMEM_MARGIN_BYTES = 4 << 20


def _round_up(n, m):
    return ((n + m - 1) // m) * m


def _cdiv(a, b):
    return (a + b - 1) // b


def _tile_batch(b, block_b):
    """Pick batch tile TB so padding is a few rows, not up to a whole tile."""
    n_tiles = max(1, _cdiv(b, block_b))
    tb = _round_up(_cdiv(b, n_tiles), SUBLANE)
    bp = _round_up(b, tb)
    return tb, bp


def _pick_subtiles(tb):
    """Independent row sub-tiles used to interleave MXU pushes with EUP work."""
    for n in (4, 2):
        if tb % (n * SUBLANE) == 0:
            return n
    return 1


def _vmem_limit(weight_bytes, io_bytes):
    need = weight_bytes + io_bytes + _VMEM_MARGIN_BYTES
    return int(min(max(need, _VMEM_FLOOR_BYTES), _VMEM_CAP_BYTES))


def _gru_cell(h_f32, x, wh_zr, wh_t, wx_all, hp):
    """One GRU cell on an already-loaded sub-tile. h_f32: (rows, Hp) float32."""
    cdt = wx_all.dtype                                   # MXU operand dtype (f32 or bf16)
    h = h_f32.astype(cdt)

    # Fused input projection: (rows, 3*Hp) = x @ [Wz_x | Wr_x | Wt_x]
    xw = jnp.dot(x.astype(cdt), wx_all, preferred_element_type=jnp.float32)
    # Fused z/r hidden projection: (rows, 2*Hp) = h @ [Wz_h | Wr_h]
    hw = jnp.dot(h, wh_zr, preferred_element_type=jnp.float32)

    # Both sigmoids on one contiguous (rows, 2*Hp) slab.
    zr = jax.nn.sigmoid(hw + xw[:, : 2 * hp])
    z = zr[:, :hp]
    r = zr[:, hp:]

    # t = tanh((r*h) @ Wt_h + x @ Wt_x)   (only this matmul depends on r)
    rh = (r * h_f32).astype(cdt)
    t = jnp.tanh(jnp.dot(rh, wh_t, preferred_element_type=jnp.float32) + xw[:, 2 * hp:])

    # h_new = (1 - z) * h + z * t  ==  h + z * (t - h)
    return h_f32 + z * (t - h_f32)


def gru_step_kernel(h_ref, x_ref, wh_zr_ref, wh_t_ref, wx_all_ref, out_ref, *, hp, n_sub):
    """One GRU step on a (TB, Hp) batch tile, sub-tiled into n_sub row chunks."""
    wh_zr = wh_zr_ref[...]
    wh_t = wh_t_ref[...]
    wx_all = wx_all_ref[...]
    rows = h_ref.shape[0] // n_sub
    for s in range(n_sub):                               # independent sub-tiles -> MXU/EUP overlap
        lo = s * rows
        hi = lo + rows
        h_f32 = h_ref[lo:hi, :].astype(jnp.float32)      # single load of h per sub-tile
        x = x_ref[lo:hi, :]
        h_new = _gru_cell(h_f32, x, wh_zr, wh_t, wx_all, hp)
        out_ref[lo:hi, :] = h_new.astype(out_ref.dtype)


def gru_seq_kernel(h0_ref, x_ref, wh_zr_ref, wh_t_ref, wx_all_ref, out_ref, h_sc, *, hp, n_sub):
    """T GRU steps fused: grid=(batch_tiles, T), h carried in VMEM scratch (f32)."""
    @pl.when(pl.program_id(1) == 0)
    def _():
        h_sc[...] = h0_ref[...].astype(jnp.float32)

    wh_zr = wh_zr_ref[...]
    wh_t = wh_t_ref[...]
    wx_all = wx_all_ref[...]
    rows = h_sc.shape[0] // n_sub
    for s in range(n_sub):
        lo = s * rows
        hi = lo + rows
        h_f32 = h_sc[lo:hi, :]
        x = x_ref[0, lo:hi, :]
        h_new = _gru_cell(h_f32, x, wh_zr, wh_t, wx_all, hp)
        h_sc[lo:hi, :] = h_new
        out_ref[0, lo:hi, :] = h_new.astype(out_ref.dtype)


def prepare_gru_weights(wz, wr, wt, hidden_size, input_size, param_dtype=jnp.float32):
    """One-time weight prep; call OUTSIDE any recurrent loop.

    wz/wr/wt: nn.Linear(hidden+input, hidden, bias=False) weights, shape (H, H+I).
    Returns fused, transposed, lane-padded weights:
        wh_zr  = [Wz_h | Wr_h]          (Hp, 2*Hp)
        wh_t   =  Wt_h                  (Hp, Hp)
        wx_all = [Wz_x | Wr_x | Wt_x]   (Ip, 3*Hp)
    """
    H, I = hidden_size, input_size
    Hp = _round_up(H, LANE)
    Ip = _round_up(I, LANE)
    # TODO(synk): if H << 128, pack multiple independent GRU cells along the lane dim
    # instead of padding a single cell to Hp=128 (avoids wasting ~(1-H/128) of the MXU).

    def split_t(w):
        return jnp.transpose(w[:, :H]), jnp.transpose(w[:, H:])

    def pad2(w, rows, cols):
        return jnp.pad(w, ((0, rows - w.shape[0]), (0, cols - w.shape[1])))

    wz_h, wz_x = split_t(wz)
    wr_h, wr_x = split_t(wr)
    wt_h, wt_x = split_t(wt)

    wh_zr = jnp.concatenate([pad2(wz_h, Hp, Hp), pad2(wr_h, Hp, Hp)], axis=1)
    wh_t = pad2(wt_h, Hp, Hp)
    wx_all = jnp.concatenate(
        [pad2(wz_x, Ip, Hp), pad2(wr_x, Ip, Hp), pad2(wt_x, Ip, Hp)], axis=1)

    return (wh_zr.astype(param_dtype),
            wh_t.astype(param_dtype),
            wx_all.astype(param_dtype))


def _weight_specs(hp, ip, n_grid_axes):
    """Constant-index, single-buffered (Buffered(1)) weight BlockSpecs."""
    if n_grid_axes == 1:
        idx = lambda i: (0, 0)
    else:
        idx = lambda i, t: (0, 0)
    return [
        pl.BlockSpec((hp, 2 * hp), idx, pipeline_mode=pl.Buffered(1)),
        pl.BlockSpec((hp, hp), idx, pipeline_mode=pl.Buffered(1)),
        pl.BlockSpec((ip, 3 * hp), idx, pipeline_mode=pl.Buffered(1)),
    ]


@functools.partial(jax.jit, static_argnames=("block_b",))
def gru_step(h_state, inp, weights, *, block_b=512):
    """Single GRU step. h_state: [B, H]; inp: [B, I]; weights from prepare_gru_weights."""
    wh_zr, wh_t, wx_all = weights
    B, H = h_state.shape
    I = inp.shape[-1]
    Hp = wh_t.shape[0]
    Ip = wx_all.shape[0]
    assert wh_zr.shape == (Hp, 2 * Hp) and wx_all.shape == (Ip, 3 * Hp)

    TB, Bp = _tile_batch(B, block_b)
    n_sub = _pick_subtiles(TB)

    h_pad = jnp.pad(h_state, ((0, Bp - B), (0, Hp - H)))
    x_pad = jnp.pad(inp, ((0, Bp - B), (0, Ip - I)))

    hsz = h_pad.dtype.itemsize
    xsz = x_pad.dtype.itemsize
    osz = h_state.dtype.itemsize
    w_bytes = sum(int(w.size) * w.dtype.itemsize for w in (wh_zr, wh_t, wx_all))
    io_bytes = 2 * (TB * Hp * hsz + TB * Ip * xsz + TB * Hp * osz)
    cost = pl.CostEstimate(
        flops=2 * Bp * (3 * Ip * Hp + 3 * Hp * Hp),
        transcendentals=3 * Bp * Hp,
        bytes_accessed=w_bytes + Bp * (Hp * hsz + Ip * xsz + Hp * osz),
    )

    out = pl.pallas_call(
        functools.partial(gru_step_kernel, hp=Hp, n_sub=n_sub),
        out_shape=jax.ShapeDtypeStruct((Bp, Hp), h_state.dtype),
        grid_spec=pltpu.PrefetchScalarGridSpec(
            num_scalar_prefetch=0,
            grid=(Bp // TB,),
            in_specs=[
                pl.BlockSpec((TB, Hp), lambda i: (i, 0)),     # h tile (double-buffered)
                pl.BlockSpec((TB, Ip), lambda i: (i, 0)),     # x tile (double-buffered)
            ] + _weight_specs(Hp, Ip, 1),                     # weights: resident, single buffer
            out_specs=pl.BlockSpec((TB, Hp), lambda i: (i, 0)),
        ),
        compiler_params=pltpu.CompilerParams(
            # TODO(synk): on v7x switch the batch axis to pltpu.CORE_PARALLEL to shard
            # across the 2 TensorCores (weights then duplicated per-TC VMEM).
            dimension_semantics=("parallel",),
            vmem_limit_bytes=_vmem_limit(w_bytes, io_bytes),
        ),
        cost_estimate=cost,
    )(h_pad, x_pad, wh_zr, wh_t, wx_all)

    return out[:B, :H]


@functools.partial(jax.jit, static_argnames=("block_b",))
def gru_sequence(h0, xs, weights, *, block_b=512):
    """Apply the GRU step over a whole sequence in ONE pallas_call.

    h0: [B, H]; xs: [T, B, I]. Returns all hidden states [T, B, H].
    Weights are DMA'd from HBM once per sequence (not once per step); the
    recurrence carry lives in a float32 VMEM scratch.
    """
    wh_zr, wh_t, wx_all = weights
    T, B, I = xs.shape
    H = h0.shape[-1]
    Hp = wh_t.shape[0]
    Ip = wx_all.shape[0]

    TB, Bp = _tile_batch(B, block_b)
    n_sub = _pick_subtiles(TB)

    h_pad = jnp.pad(h0, ((0, Bp - B), (0, Hp - H)))
    x_pad = jnp.pad(xs, ((0, 0), (0, Bp - B), (0, Ip - I)))

    hsz = h_pad.dtype.itemsize
    xsz = x_pad.dtype.itemsize
    osz = h0.dtype.itemsize
    w_bytes = sum(int(w.size) * w.dtype.itemsize for w in (wh_zr, wh_t, wx_all))
    io_bytes = (2 * (TB * Hp * hsz + TB * Ip * xsz + TB * Hp * osz)
                + TB * Hp * 4)                            # f32 carry scratch
    cost = pl.CostEstimate(
        flops=2 * T * Bp * (3 * Ip * Hp + 3 * Hp * Hp),
        transcendentals=3 * T * Bp * Hp,
        bytes_accessed=w_bytes + Bp * Hp * hsz + T * Bp * (Ip * xsz + Hp * osz),
    )

    out = pl.pallas_call(
        functools.partial(gru_seq_kernel, hp=Hp, n_sub=n_sub),
        out_shape=jax.ShapeDtypeStruct((T, Bp, Hp), h0.dtype),
        grid_spec=pltpu.PrefetchScalarGridSpec(
            num_scalar_prefetch=0,
            grid=(Bp // TB, T),                           # batch outer (parallel), time inner
            in_specs=[
                pl.BlockSpec((TB, Hp), lambda i, t: (i, 0)),        # h0 tile
                pl.BlockSpec((1, TB, Ip), lambda i, t: (t, i, 0)),  # x[t] tile
            ] + _weight_specs(Hp, Ip, 2),
            out_specs=pl.BlockSpec((1, TB, Hp), lambda i, t: (t, i, 0)),
            scratch_shapes=[pltpu.VMEM((TB, Hp), jnp.float32)],     # recurrence carry
        ),
        compiler_params=pltpu.CompilerParams(
            dimension_semantics=("parallel", "arbitrary"),
            vmem_limit_bytes=_vmem_limit(w_bytes, io_bytes),
        ),
        cost_estimate=cost,
    )(h_pad, x_pad, wh_zr, wh_t, wx_all)

    return out[:, :B, :H]


def gru_step_ref(h_state, inp, wz, wr, wt):
    hx = jnp.concatenate([h_state, inp], axis=-1)
    z = jax.nn.sigmoid(hx @ wz.T)
    r = jax.nn.sigmoid(hx @ wr.T)
    rhx = jnp.concatenate([r * h_state, inp], axis=-1)
    t = jnp.tanh(rhx @ wt.T)
    return (1.0 - z) * h_state + z * t


if __name__ == "__main__":
    hidden_size = 32
    input_size = 16
    batch = 8

    key = jax.random.PRNGKey(0)
    k_h, k_x, k_wz, k_wr, k_wt, k_h2, k_x2, k_seq = jax.random.split(key, 8)

    h_state = jax.random.normal(k_h, (batch, hidden_size), dtype=jnp.float32)
    inp = jax.random.normal(k_x, (batch, input_size), dtype=jnp.float32)

    # nn.Linear(hidden+input, hidden, bias=False) weights: (hidden, hidden+input)
    bound = 1.0 / (hidden_size + input_size) ** 0.5
    wz = jax.random.uniform(k_wz, (hidden_size, hidden_size + input_size),
                            minval=-bound, maxval=bound, dtype=jnp.float32)
    wr = jax.random.uniform(k_wr, (hidden_size, hidden_size + input_size),
                            minval=-bound, maxval=bound, dtype=jnp.float32)
    wt = jax.random.uniform(k_wt, (hidden_size, hidden_size + input_size),
                            minval=-bound, maxval=bound, dtype=jnp.float32)

    ref = gru_step_ref(h_state, inp, wz, wr, wt)

    # f32 weights: bitwise-close to the reference.
    w_f32 = prepare_gru_weights(wz, wr, wt, hidden_size, input_size, jnp.float32)
    out = jax.block_until_ready(gru_step(h_state, inp, w_f32))
    assert out.shape == (batch, hidden_size)
    assert jnp.allclose(out, ref, atol=1e-5, rtol=1e-5), "f32 mismatch vs reference"

    # Multi-tile + sub-tiled path (TB=16, n_sub=2, ragged batch padding).
    batch2 = 40
    h2 = jax.random.normal(k_h2, (batch2, hidden_size), dtype=jnp.float32)
    x2 = jax.random.normal(k_x2, (batch2, input_size), dtype=jnp.float32)
    ref2 = gru_step_ref(h2, x2, wz, wr, wt)
    out2 = jax.block_until_ready(gru_step(h2, x2, w_f32, block_b=16))
    assert jnp.allclose(out2, ref2, atol=1e-5, rtol=1e-5), "multi-tile mismatch vs reference"

    # bf16 weights (perf option): looser tolerance, f32 accumulation.
    w_bf16 = prepare_gru_weights(wz, wr, wt, hidden_size, input_size, jnp.bfloat16)
    out_bf16 = jax.block_until_ready(gru_step(h_state, inp, w_bf16))
    assert jnp.allclose(out_bf16, ref, atol=5e-2, rtol=5e-2), "bf16 mismatch vs reference"

    # Fused recurrence: T steps in one pallas_call (weights fetched once).
    T = 6
    xs = jax.random.normal(k_seq, (T, batch, input_size), dtype=jnp.float32)
    h_cur = h_state
    hs_ref = []
    for t in range(T):
        h_cur = gru_step_ref(h_cur, xs[t], wz, wr, wt)
        hs_ref.append(h_cur)
    hs_ref = jnp.stack(hs_ref)
    hs = jax.block_until_ready(gru_sequence(h_state, xs, w_f32))
    assert hs.shape == (T, batch, hidden_size)
    assert jnp.allclose(hs, hs_ref, atol=1e-4, rtol=1e-4), "sequence mismatch vs reference"

    print("KERNEL_OK")
</pallas_src>

<mosaic_0001>
module attributes {stable_mosaic.version = 11 : i64} {
  func.func @gru_step_kernel(%arg0: i32, %arg1: memref<8x128xf32, #tpu.memory_space<vmem>>, %arg2: memref<8x128xf32, #tpu.memory_space<vmem>>, %arg3: memref<128x256xf32, #tpu.memory_space<vmem>>, %arg4: memref<128x128xf32, #tpu.memory_space<vmem>>, %arg5: memref<128x384xf32, #tpu.memory_space<vmem>>, %arg6: memref<8x128xf32, #tpu.memory_space<vmem>>) attributes {dimension_semantics = [#tpu.dimension_semantics<parallel>], iteration_bounds = array<i64: 1>, scalar_prefetch = 0 : i64, scratch_operands = 0 : i64, tpu.core_type = #tpu.core_type<tc>, window_params = [{transform_indices = @transform_0, window_bounds = array<i64: 8, 128>}, {transform_indices = @transform_1, window_bounds = array<i64: 8, 128>}, {pipeline_mode = #tpu.pipeline_mode<synchronous>, transform_indices = @transform_2, window_bounds = array<i64: 128, 256>}, {pipeline_mode = #tpu.pipeline_mode<synchronous>, transform_indices = @transform_3, window_bounds = array<i64: 128, 128>}, {pipeline_mode = #tpu.pipeline_mode<synchronous>, transform_indices = @transform_4, window_bounds = array<i64: 128, 384>}, {transform_indices = @transform_5, window_bounds = array<i64: 8, 128>}]} {
    %c0 = arith.constant 0 : index
    %c0_0 = arith.constant 0 : index
    %0 = vector.load %arg3[%c0, %c0_0] : memref<128x256xf32, #tpu.memory_space<vmem>>, vector<128x256xf32>
    %c0_1 = arith.constant 0 : index
    %c0_2 = arith.constant 0 : index
    %1 = vector.load %arg4[%c0_1, %c0_2] : memref<128x128xf32, #tpu.memory_space<vmem>>, vector<128x128xf32>
    %c0_3 = arith.constant 0 : index
    %c0_4 = arith.constant 0 : index
    %2 = vector.load %arg5[%c0_3, %c0_4] : memref<128x384xf32, #tpu.memory_space<vmem>>, vector<128x384xf32>
    %c0_5 = arith.constant 0 : index
    %c0_6 = arith.constant 0 : index
    %3 = vector.load %arg1[%c0_5, %c0_6] : memref<8x128xf32, #tpu.memory_space<vmem>>, vector<8x128xf32>
    %c0_7 = arith.constant 0 : index
    %c0_8 = arith.constant 0 : index
    %4 = vector.load %arg2[%c0_7, %c0_8] : memref<8x128xf32, #tpu.memory_space<vmem>>, vector<8x128xf32>
    %cst = arith.constant dense<0.000000e+00> : vector<8x384xf32>
    %5 = tpu.matmul %4, %2, %cst {dimension_numbers = #tpu.dot_dimension_numbers<[1], [0], [0], [1], [0, 0, 1, 1], [], []>} : vector<8x128xf32>, vector<128x384xf32>, vector<8x384xf32> -> vector<8x384xf32>
    %cst_9 = arith.constant dense<0.000000e+00> : vector<8x256xf32>
    %6 = tpu.matmul %3, %0, %cst_9 {dimension_numbers = #tpu.dot_dimension_numbers<[1], [0], [0], [1], [0, 0, 1, 1], [], []>} : vector<8x128xf32>, vector<128x256xf32>, vector<8x256xf32> -> vector<8x256xf32>
    %7 = vector.extract_strided_slice %5 {offsets = [0, 0], sizes = [8, 256], strides = [1, 1]} : vector<8x384xf32> to vector<8x256xf32>
    %8 = arith.addf %6, %7 : vector<8x256xf32>
    %9 = arith.negf %8 : vector<8x256xf32>
    %10 = math.exp %9 : vector<8x256xf32>
    %cst_10 = arith.constant 1.000000e+00 : f32
    %11 = vector.broadcast %cst_10 : f32 to vector<8x256xf32>
    %12 = arith.addf %11, %10 : vector<8x256xf32>
    %13 = arith.divf %11, %12 : vector<8x256xf32>
    %14 = vector.extract_strided_slice %13 {offsets = [0, 0], sizes = [8, 128], strides = [1, 1]} : vector<8x256xf32> to vector<8x128xf32>
    %15 = vector.extract_strided_slice %13 {offsets = [0, 128], sizes = [8, 128], strides = [1, 1]} : vector<8x256xf32> to vector<8x128xf32>
    %16 = arith.mulf %15, %3 : vector<8x128xf32>
    %cst_11 = arith.constant dense<0.000000e+00> : vector<8x128xf32>
    %17 = tpu.matmul %16, %1, %cst_11 {dimension_numbers = #tpu.dot_dimension_numbers<[1], [0], [0], [1], [0, 0, 1, 1], [], []>} : vector<8x128xf32>, vector<128x128xf32>, vector<8x128xf32> -> vector<8x128xf32>
    %18 = vector.extract_strided_slice %5 {offsets = [0, 256], sizes = [8, 128], strides = [1, 1]} : vector<8x384xf32> to vector<8x128xf32>
    %19 = arith.addf %17, %18 : vector<8x128xf32>
    %20 = math.tanh %19 : vector<8x128xf32>
    %21 = arith.subf %20, %3 : vector<8x128xf32>
    %22 = arith.mulf %14, %21 : vector<8x128xf32>
    %23 = arith.addf %3, %22 : vector<8x128xf32>
    %c0_12 = arith.constant 0 : index
    %c0_13 = arith.constant 0 : index
    %24 = vector.load %arg6[%c0_12, %c0_13] : memref<8x128xf32, #tpu.memory_space<vmem>>, vector<8x128xf32>
    tpu.vector_store %arg6[%c0_12, %c0_13], %23 {strides = array<i32>} : memref<8x128xf32, #tpu.memory_space<vmem>>, vector<8x128xf32>,
    return
  }
  func.func @transform_0(%arg0: i32) -> (i32, i32) {
    %c0_i32 = arith.constant 0 : i32
    %c0_i32_0 = arith.constant 0 : i32
    return %arg0, %c0_i32 : i32, i32
  }
  func.func @transform_1(%arg0: i32) -> (i32, i32) {
    %c0_i32 = arith.constant 0 : i32
    %c0_i32_0 = arith.constant 0 : i32
    return %arg0, %c0_i32 : i32, i32
  }
  func.func @transform_2(%arg0: i32) -> (i32, i32) {
    %c0_i32 = arith.constant 0 : i32
    %c0_i32_0 = arith.constant 0 : i32
    %c0_i32_1 = arith.constant 0 : i32
    return %c0_i32, %c0_i32_0 : i32, i32
  }
  func.func @transform_3(%arg0: i32) -> (i32, i32) {
    %c0_i32 = arith.constant 0 : i32
    %c0_i32_0 = arith.constant 0 : i32
    %c0_i32_1 = arith.constant 0 : i32
    return %c0_i32, %c0_i32_0 : i32, i32
  }
  func.func @transform_4(%arg0: i32) -> (i32, i32) {
    %c0_i32 = arith.constant 0 : i32
    %c0_i32_0 = arith.constant 0 : i32
    %c0_i32_1 = arith.constant 0 : i32
    return %c0_i32, %c0_i32_0 : i32, i32
  }
  func.func @transform_5(%arg0: i32) -> (i32, i32) {
    %c0_i32 = arith.constant 0 : i32
    %c0_i32_0 = arith.constant 0 : i32
    return %arg0, %c0_i32 : i32, i32
  }
}

</mosaic_0001>

<llo_original>
// kernel: gru_step.1
$region0: #{gru_step.1}
  #allocation0 [shape = 'u32[]', space=smem, size = 0x4, offset = 0x4, fixed_abs, tag = 'smem constant byte address 0x4 - core index']
  #allocation1 [shape = 'u32[144,128]{1,0:T(1,128)}', space=vmem, size = 0x12000, scoped, tag = 'internal scratch']
  %s0 = inlined_call_operand.vmem [shape: f32[8,128], index: 0, kind: input, shape index: {}]
  %s1 = inlined_call_operand.vmem [shape: f32[8,128], index: 1, kind: input, shape index: {}]
  %s2 = inlined_call_operand.hbm [shape: f32[128,256], index: 2, kind: input, shape index: {}]
  %s3 = inlined_call_operand.hbm [shape: f32[128,128], index: 3, kind: input, shape index: {}]
  %s4 = inlined_call_operand.hbm [shape: f32[128,384], index: 4, kind: input, shape index: {}]
  %s5 = inlined_call_operand.hbm [shape: f32[8,128], index: 5, kind: output, shape index: {}]
  %s6 = sld [smem:[#allocation0]]
  $region42: #{gru_step.1} parent=0
    _
  %s8 = ssub.s32 1, %s6
  %s9 = scalar_select 0, %s8, %s6
  $region1: #{gru_step.1} parent=0
    #allocation2 [shape = 'u8[131072]{0}', space=vmem, size = 0x20000, scoped, tag = 'input window, operand 2, single buffered']
    #allocation3 [shape = 's32[1]{0}', space=sflag, size = 0x4, scoped, tag = 'scoped memory for gru_step.1']
    #allocation4 [shape = 's32[1]{0}', space=sflag, size = 0x4, scoped, tag = 'scoped memory for gru_step.1']
    #allocation5 [shape = 'u8[65536]{0}', space=vmem, size = 0x10000, scoped, tag = 'input window, operand 3, single buffered']
    #allocation6 [shape = 's32[1]{0}', space=sflag, size = 0x4, scoped, tag = 'scoped memory for gru_step.1']
    #allocation7 [shape = 'u8[196608]{0}', space=vmem, size = 0x30000, scoped, tag = 'input window, operand 4, single buffered']
    #allocation8 [shape = 'u8[4096]{0}', space=vmem, size = 0x1000, scoped, tag = 'output window, operand 0, single buffered']
    %10 = vsyncpa [#allocation3], 0
    %11 = vsyncpa [#allocation6], 0
    %12 = vsyncpa [#allocation4], 0
    // Predicated region
    $region2: #{gru_step.1} parent=1 // pred_check
      _
    $region3: #{gru_step.1} parent=1 // pred_check_branch
      %14 = sbr.rel (0) target = $region5
    $region4: #{gru_step.1} parent=1 // pred_region
      _
    $region5: #{gru_step.1} parent=1 // pred_fallthru
      _
    // Predicated region
    $region6: #{gru_step.1} parent=1 // pred_check
      _
    $region7: #{gru_step.1} parent=1 // pred_check_branch
      %16 = sbr.rel (0) target = $region9
    $region8: #{gru_step.1} parent=1 // pred_region
      _
    $region9: #{gru_step.1} parent=1 // pred_fallthru
      _
    // Predicated region
    $region10: #{gru_step.1} parent=1 // pred_check
      _
    $region11: #{gru_step.1} parent=1 // pred_check_branch
      %18 = sbr.rel (0) target = $region13
    $region12: #{gru_step.1} parent=1 // pred_region
      %s20 = ssub.s32 4096, 4096
      %21 = vsyncadd [#allocation3], %s20
      %s22 = sshll.u32 [#allocation2], 4
      %s23 = int_to_ptr.vmem [resolvable:$true] %s22
      %28 = dma.hbm_to_vmem [thread:$0]  %s2, 4096, %s23, [#allocation3], 256, 256, 16
    $region13: #{gru_step.1} parent=1 // pred_fallthru
      _
    // Predicated region
    $region14: #{gru_step.1} parent=1 // pred_check
      _
    $region15: #{gru_step.1} parent=1 // pred_check_branch
      %30 = sbr.rel (0) target = $region17
    $region16: #{gru_step.1} parent=1 // pred_region
      %s32 = ssub.s32 2048, 2048
      %33 = vsyncadd [#allocation6], %s32
      %s34 = sshll.u32 [#allocation5], 4
      %s35 = int_to_ptr.vmem [resolvable:$true] %s34
      %40 = dma.hbm_to_vmem [thread:$0]  %s3, 2048, %s35, [#allocation6], 128, 128, 8
    $region17: #{gru_step.1} parent=1 // pred_fallthru
      _
    // Predicated region
    $region18: #{gru_step.1} parent=1 // pred_check
      _
    $region19: #{gru_step.1} parent=1 // pred_check_branch
      %42 = sbr.rel (0) target = $region21
    $region20: #{gru_step.1} parent=1 // pred_region
      %s44 = ssub.s32 6144, 6144
      %45 = vsyncadd [#allocation6], %s44
      %s46 = sshll.u32 [#allocation7], 4
      %s47 = int_to_ptr.vmem [resolvable:$true] %s46
      %52 = dma.hbm_to_vmem [thread:$0]  %s4, 6144, %s47, [#allocation6], 384, 384, 24
    $region21: #{gru_step.1} parent=1 // pred_fallthru
      _
    // Predicated region
    $region22: #{gru_step.1} parent=1 // pred_check
      _
    $region23: #{gru_step.1} parent=1 // pred_check_branch
      %54 = sbr.rel (0) target = $region25
    $region24: #{gru_step.1} parent=1 // pred_region
      %55 = dma.done [#allocation3], 4096
    $region25: #{gru_step.1} parent=1 // pred_fallthru
      _
    // Predicated region
    $region26: #{gru_step.1} parent=1 // pred_check
      _
    $region27: #{gru_step.1} parent=1 // pred_check_branch
      %57 = sbr.rel (0) target = $region29
    $region28: #{gru_step.1} parent=1 // pred_region
      %58 = dma.done [#allocation6], 2048
    $region29: #{gru_step.1} parent=1 // pred_fallthru
      _
    // Predicated region
    $region30: #{gru_step.1} parent=1 // pred_check
      _
    $region31: #{gru_step.1} parent=1 // pred_check_branch
      %60 = sbr.rel (0) target = $region33
    $region32: #{gru_step.1} parent=1 // pred_region
      %61 = dma.done [#allocation6], 6144
    $region33: #{gru_step.1} parent=1 // pred_fallthru
      _
    %v62 = vld [vmem:[#allocation2] sm:$0xff]
    %v63 = vld [vmem:[#allocation2 + $0x8] sm:$0xff]
    %v64 = vld [vmem:[#allocation2 + $0x10] sm:$0xff]
    %v65 = vld [vmem:[#allocation2 + $0x18] sm:$0xff]
    %v66 = vld [vmem:[#allocation2 + $0x20] sm:$0xff]
    %v67 = vld [vmem:[#allocation2 + $0x28] sm:$0xff]
    %v68 = vld [vmem:[#allocation2 + $0x30] sm:$0xff]
    %v69 = vld [vmem:[#allocation2 + $0x38] sm:$0xff]
    %v70 = vld [vmem:[#allocation2 + $0x40] sm:$0xff]
    %v71 = vld [vmem:[#allocation2 + $0x48] sm:$0xff]
    %v72 = vld [vmem:[#allocation2 + $0x50] sm:$0xff]
    %v73 = vld [vmem:[#allocation2 + $0x58] sm:$0xff]
    %v74 = vld [vmem:[#allocation2 + $0x60] sm:$0xff]
    %v75 = vld [vmem:[#allocation2 + $0x68] sm:$0xff]
    %v76 = vld [vmem:[#allocation2 + $0x70] sm:$0xff]
    %v77 = vld [vmem:[#allocation2 + $0x78] sm:$0xff]
    %v78 = vld [vmem:[#allocation2 + $0x80] sm:$0xff]
    %v79 = vld [vmem:[#allocation2 + $0x88] sm:$0xff]
    %v80 = vld [vmem:[#allocation2 + $0x90] sm:$0xff]
    %v81 = vld [vmem:[#allocation2 + $0x98] sm:$0xff]
    %v82 = vld [vmem:[#allocation2 + $0xa0] sm:$0xff]
    %v83 = vld [vmem:[#allocation2 + $0xa8] sm:$0xff]
    %v84 = vld [vmem:[#allocation2 + $0xb0] sm:$0xff]
    %v85 = vld [vmem:[#allocation2 + $0xb8] sm:$0xff]
    %v86 = vld [vmem:[#allocation2 + $0xc0] sm:$0xff]
    %v87 = vld [vmem:[#allocation2 + $0xc8] sm:$0xff]
    %v88 = vld [vmem:[#allocation2 + $0xd0] sm:$0xff]
    %v89 = vld [vmem:[#allocation2 + $0xd8] sm:$0xff]
    %v90 = vld [vmem:[#allocation2 + $0xe0] sm:$0xff]
    %v91 = vld [vmem:[#allocation2 + $0xe8] sm:$0xff]
    %v92 = vld [vmem:[#allocation2 + $0xf0] sm:$0xff]
    %v93 = vld [vmem:[#allocation2 + $0xf8] sm:$0xff]
    %v94 = vld [vmem:[#allocation5] sm:$0xff]
    %v95 = vld [vmem:[#allocation5 + $0x8] sm:$0xff]
    %v96 = vld [vmem:[#allocation5 + $0x10] sm:$0xff]
    %v97 = vld [vmem:[#allocation5 + $0x18] sm:$0xff]
    %v98 = vld [vmem:[#allocation5 + $0x20] sm:$0xff]
    %v99 = vld [vmem:[#allocation5 + $0x28] sm:$0xff]
    %v100 = vld [vmem:[#allocation5 + $0x30] sm:$0xff]
    %v101 = vld [vmem:[#allocation5 + $0x38] sm:$0xff]
    %v102 = vld [vmem:[#allocation5 + $0x40] sm:$0xff]
    %v103 = vld [vmem:[#allocation5 + $0x48] sm:$0xff]
    %v104 = vld [vmem:[#allocation5 + $0x50] sm:$0xff]
    %v105 = vld [vmem:[#allocation5 + $0x58] sm:$0xff]
    %v106 = vld [vmem:[#allocation5 + $0x60] sm:$0xff]
    %v107 = vld [vmem:[#allocation5 + $0x68] sm:$0xff]
    %v108 = vld [vmem:[#allocation5 + $0x70] sm:$0xff]
    %v109 = vld [vmem:[#allocation5 + $0x78] sm:$0xff]
    %v110 = vld [vmem:[#allocation7] sm:$0xff]
    %v111 = vld [vmem:[#allocation7 + $0x8] sm:$0xff]
    %v112 = vld [vmem:[#allocation7 + $0x10] sm:$0xff]
    %v113 = vld [vmem:[#allocation7 + $0x18] sm:$0xff]
    %v114 = vld [vmem:[#allocation7 + $0x20] sm:$0xff]
    %v115 = vld [vmem:[#allocation7 + $0x28] sm:$0xff]
    %v116 = vld [vmem:[#allocation7 + $0x30] sm:$0xff]
    %v117 = vld [vmem:[#allocation7 + $0x38] sm:$0xff]
    %v118 = vld [vmem:[#allocation7 + $0x40] sm:$0xff]
    %v119 = vld [vmem:[#allocation7 + $0x48] sm:$0xff]
    %v120 = vld [vmem:[#allocation7 + $0x50] sm:$0xff]
    %v121 = vld [vmem:[#allocation7 + $0x58] sm:$0xff]
    %v122 = vld [vmem:[#allocation7 + $0x60] sm:$0xff]
    %v123 = vld [vmem:[#allocation7 + $0x68] sm:$0xff]
    %v124 = vld [vmem:[#allocation7 + $0x70] sm:$0xff]
    %v125 = vld [vmem:[#allocation7 + $0x78] sm:$0xff]
    %v126 = vld [vmem:[#allocation7 + $0x80] sm:$0xff]
    %v127 = vld [vmem:[#allocation7 + $0x88] sm:$0xff]
    %v128 = vld [vmem:[#allocation7 + $0x90] sm:$0xff]
    %v129 = vld [vmem:[#allocation7 + $0x98] sm:$0xff]
    %v130 = vld [vmem:[#allocation7 + $0xa0] sm:$0xff]
    %v131 = vld [vmem:[#allocation7 + $0xa8] sm:$0xff]
    %v132 = vld [vmem:[#allocation7 + $0xb0] sm:$0xff]
    %v133 = vld [vmem:[#allocation7 + $0xb8] sm:$0xff]
    %v134 = vld [vmem:[#allocation7 + $0xc0] sm:$0xff]
    %v135 = vld [vmem:[#allocation7 + $0xc8] sm:$0xff]
    %v136 = vld [vmem:[#allocation7 + $0xd0] sm:$0xff]
    %v137 = vld [vmem:[#allocation7 + $0xd8] sm:$0xff]
    %v138 = vld [vmem:[#allocation7 + $0xe0] sm:$0xff]
    %v139 = vld [vmem:[#allocation7 + $0xe8] sm:$0xff]
    %v140 = vld [vmem:[#allocation7 + $0xf0] sm:$0xff]
    %v141 = vld [vmem:[#allocation7 + $0xf8] sm:$0xff]
    %v142 = vld [vmem:[#allocation7 + $0x100] sm:$0xff]
    %v143 = vld [vmem:[#allocation7 + $0x108] sm:$0xff]
    %v144 = vld [vmem:[#allocation7 + $0x110] sm:$0xff]
    %v145 = vld [vmem:[#allocation7 + $0x118] sm:$0xff]
    %v146 = vld [vmem:[#allocation7 + $0x120] sm:$0xff]
    %v147 = vld [vmem:[#allocation7 + $0x128] sm:$0xff]
    %v148 = vld [vmem:[#allocation7 + $0x130] sm:$0xff]
    %v149 = vld [vmem:[#allocation7 + $0x138] sm:$0xff]
    %v150 = vld [vmem:[#allocation7 + $0x140] sm:$0xff]
    %v151 = vld [vmem:[#allocation7 + $0x148] sm:$0xff]
    %v152 = vld [vmem:[#allocation7 + $0x150] sm:$0xff]
    %v153 = vld [vmem:[#allocation7 + $0x158] sm:$0xff]
    %v154 = vld [vmem:[#allocation7 + $0x160] sm:$0xff]
    %v155 = vld [vmem:[#allocation7 + $0x168] sm:$0xff]
    %v156 = vld [vmem:[#allocation7 + $0x170] sm:$0xff]
    %v157 = vld [vmem:[#allocation7 + $0x178] sm:$0xff]
    %v158 = vld [vmem:[%s0] sm:$0xff]
    %v159 = vld [vmem:[%s1] sm:$0xff]
    %160 = vmatprep.subr.mxu0 %v156
    %161 = vmatpush1.msra.mxu0 %v155
    %162 = vmatprep.subr.mxu0 %v153
    %163 = vmatpush1.msra.mxu0 %v152
    %164 = vmatprep.subr.mxu0 %v150
    %165 = vmatpush1.msra.mxu0 %v149
    %166 = vmatprep.subr.mxu0 %v147
    %167 = vmatpush1.msra.mxu0 %v146
    %168 = vmatprep.subr.mxu0 %v144
    %169 = vmatpush1.msra.mxu0 %v143
    %170 = vmatprep.subr.mxu0 %v141
    %171 = vmatpush1.msra.mxu0 %v140
    %172 = vmatprep.subr.mxu0 %v138
    %173 = vmatpush1.msra.mxu0 %v137
    %174 = vmatprep.subr.mxu0 %v135
    %175 = vmatpush1.msra.mxu0 %v134
    %176 = vmatprep.subr.mxu0 %v132
    %177 = vmatpush1.msra.mxu0 %v131
    %178 = vmatprep.subr.mxu0 %v129
    %179 = vmatpush1.msra.mxu0 %v128
    %180 = vmatprep.subr.mxu0 %v126
    %181 = vmatpush1.msra.mxu0 %v125
    %182 = vmatprep.subr.mxu0 %v123
    %183 = vmatpush1.msra.mxu0 %v122
    %184 = vmatprep.subr.mxu0 %v120
    %185 = vmatpush1.msra.mxu0 %v119
    %186 = vmatprep.subr.mxu0 %v117
    %187 = vmatpush1.msra.mxu0 %v116
    %188 = vmatprep.subr.mxu0 %v114
    %189 = vmatpush1.msra.mxu0 %v113
    %190 = vmatprep.subr.mxu0 %v111
    %191 = vmatpush1.msra.mxu0 %v110
    %192 = vmatprep.subr.mxu0 0.0
    %193 = vmatpush2.msra.mxu0 0.0
    %194 = vmatprep.subr.mxu0 0.0
    %195 = vmatpush2.msra.mxu0 0.0
    %196 = vmatprep.subr.mxu0 0.0
    %197 = vmatpush2.msra.mxu0 0.0
    %198 = vmatprep.subr.mxu0 0.0
    %199 = vmatpush2.msra.mxu0 0.0
    %200 = vmatprep.subr.mxu0 0.0
    %201 = vmatpush2.msra.mxu0 0.0
    %202 = vmatprep.subr.mxu0 0.0
    %203 = vmatpush2.msra.mxu0 0.0
    %204 = vmatprep.subr.mxu0 0.0
    %205 = vmatpush2.msra.mxu0 0.0
    %206 = vmatprep.subr.mxu0 0.0
    %207 = vmatpush2.msra.mxu0 0.0
    %208 = vmatprep.subr.mxu0 0.0
    %209 = vmatpush2.msra.mxu0 0.0
    %210 = vmatprep.subr.mxu0 0.0
    %211 = vmatpush2.msra.mxu0 0.0
    %212 = vmatprep.subr.mxu0 0.0
    %213 = vmatpush2.msra.mxu0 0.0
    %214 = vmatprep.subr.mxu0 0.0
    %215 = vmatpush2.msra.mxu0 0.0
    %216 = vmatprep.subr.mxu0 0.0
    %217 = vmatpush2.msra.mxu0 0.0
    %218 = vmatprep.subr.mxu0 0.0
    %219 = vmatpush2.msra.mxu0 0.0
    %220 = vmatprep.subr.mxu0 0.0
    %221 = vmatpush2.msra.mxu0 0.0
    %222 = vmatprep.subr.mxu0 0.0
    %223 = vmatpush2.msra.mxu0 0.0
    %224 = vmatprep.mubr.f32.mxu0 0.0
    %225 = vmatmul.mubr.f32.gmra.mxu0 %v159
    %v226 = vpop.f32.mrf.mxu0
    %v227 = vadd.f32 0.0, %v226
    %v228 = vpop.f32.mrf.mxu0
    %v229 = vadd.f32 0.0, %v228
    %230 = vdwg.mxu0
    %231 = vmatprep.subr.mxu0 0.0
    %232 = vmatpush1.msra.mxu0 %v157
    %233 = vmatprep.subr.mxu0 0.0
    %234 = vmatpush1.msra.mxu0 %v154
    %235 = vmatprep.subr.mxu0 0.0
    %236 = vmatpush1.msra.mxu0 %v151
    %237 = vmatprep.subr.mxu0 0.0
    %238 = vmatpush1.msra.mxu0 %v148
    %239 = vmatprep.subr.mxu0 0.0
    %240 = vmatpush1.msra.mxu0 %v145
    %241 = vmatprep.subr.mxu0 0.0
    %242 = vmatpush1.msra.mxu0 %v142
    %243 = vmatprep.subr.mxu0 0.0
    %244 = vmatpush1.msra.mxu0 %v139
    %245 = vmatprep.subr.mxu0 0.0
    %246 = vmatpush1.msra.mxu0 %v136
    %247 = vmatprep.subr.mxu0 0.0
    %248 = vmatpush1.msra.mxu0 %v133
    %249 = vmatprep.subr.mxu0 0.0
    %250 = vmatpush1.msra.mxu0 %v130
    %251 = vmatprep.subr.mxu0 0.0
    %252 = vmatpush1.msra.mxu0 %v127
    %253 = vmatprep.subr.mxu0 0.0
    %254 = vmatpush1.msra.mxu0 %v124
    %255 = vmatprep.subr.mxu0 0.0
    %256 = vmatpush1.msra.mxu0 %v121
    %257 = vmatprep.subr.mxu0 0.0
    %258 = vmatpush1.msra.mxu0 %v118
    %259 = vmatprep.subr.mxu0 0.0
    %260 = vmatpush1.msra.mxu0 %v115
    %261 = vmatprep.subr.mxu0 0.0
    %262 = vmatpush1.msra.mxu0 %v112
    %263 = vmatprep.subr.mxu0 0.0
    %264 = vmatpush2.msra.mxu0 0.0
    %265 = vmatprep.subr.mxu0 0.0
    %266 = vmatpush2.msra.mxu0 0.0
    %267 = vmatprep.subr.mxu0 0.0
    %268 = vmatpush2.msra.mxu0 0.0
    %269 = vmatprep.subr.mxu0 0.0
    %270 = vmatpush2.msra.mxu0 0.0
    %271 = vmatprep.subr.mxu0 0.0
    %272 = vmatpush2.msra.mxu0 0.0
    %273 = vmatprep.subr.mxu0 0.0
    %274 = vmatpush2.msra.mxu0 0.0
    %275 = vmatprep.subr.mxu0 0.0
    %276 = vmatpush2.msra.mxu0 0.0
    %277 = vmatprep.subr.mxu0 0.0
    %278 = vmatpush2.msra.mxu0 0.0
    %279 = vmatprep.subr.mxu0 0.0
    %280 = vmatpush2.msra.mxu0 0.0
    %281 = vmatprep.subr.mxu0 0.0
    %282 = vmatpush2.msra.mxu0 0.0
    %283 = vmatprep.subr.mxu0 0.0
    %284 = vmatpush2.msra.mxu0 0.0
    %285 = vmatprep.subr.mxu0 0.0
    %286 = vmatpush2.msra.mxu0 0.0
    %287 = vmatprep.subr.mxu0 0.0
    %288 = vmatpush2.msra.mxu0 0.0
    %289 = vmatprep.subr.mxu0 0.0
    %290 = vmatpush2.msra.mxu0 0.0
    %291 = vmatprep.subr.mxu0 0.0
    %292 = vmatpush2.msra.mxu0 0.0
    %293 = vmatprep.subr.mxu0 0.0
    %294 = vmatpush2.msra.mxu0 0.0
    %295 = vmatprep.mubr.f32.mxu0 0.0
    %296 = vmatmul.mubr.f32.gmra.mxu0 %v159
    %v297 = vpop.f32.mrf.mxu0
    %v298 = vadd.f32 0.0, %v297
    %v299 = vpop.f32.mrf.mxu0
    %300 = vdwg.mxu0
    %301 = vmatprep.subr.mxu0 %v93
    %302 = vmatpush1.msra.mxu0 %v92
    %303 = vmatprep.subr.mxu0 %v91
    %304 = vmatpush1.msra.mxu0 %v90
    %305 = vmatprep.subr.mxu0 %v89
    %306 = vmatpush1.msra.mxu0 %v88
    %307 = vmatprep.subr.mxu0 %v87
    %308 = vmatpush1.msra.mxu0 %v86
    %309 = vmatprep.subr.mxu0 %v85
    %310 = vmatpush1.msra.mxu0 %v84
    %311 = vmatprep.subr.mxu0 %v83
    %312 = vmatpush1.msra.mxu0 %v82
    %313 = vmatprep.subr.mxu0 %v81
    %314 = vmatpush1.msra.mxu0 %v80
    %315 = vmatprep.subr.mxu0 %v79
    %316 = vmatpush1.msra.mxu0 %v78
    %317 = vmatprep.subr.mxu0 %v77
    %318 = vmatpush1.msra.mxu0 %v76
    %319 = vmatprep.subr.mxu0 %v75
    %320 = vmatpush1.msra.mxu0 %v74
    %321 = vmatprep.subr.mxu0 %v73
    %322 = vmatpush1.msra.mxu0 %v72
    %323 = vmatprep.subr.mxu0 %v71
    %324 = vmatpush1.msra.mxu0 %v70
    %325 = vmatprep.subr.mxu0 %v69
    %326 = vmatpush1.msra.mxu0 %v68
    %327 = vmatprep.subr.mxu0 %v67
    %328 = vmatpush1.msra.mxu0 %v66
    %329 = vmatprep.subr.mxu0 %v65
    %330 = vmatpush1.msra.mxu0 %v64
    %331 = vmatprep.subr.mxu0 %v63
    %332 = vmatpush1.msra.mxu0 %v62
    %333 = vmatprep.subr.mxu0 0.0
    %334 = vmatpush2.msra.mxu0 0.0
    %335 = vmatprep.subr.mxu0 0.0
    %336 = vmatpush2.msra.mxu0 0.0
    %337 = vmatprep.subr.mxu0 0.0
    %338 = vmatpush2.msra.mxu0 0.0
    %339 = vmatprep.subr.mxu0 0.0
    %340 = vmatpush2.msra.mxu0 0.0
    %341 = vmatprep.subr.mxu0 0.0
    %342 = vmatpush2.msra.mxu0 0.0
    %343 = vmatprep.subr.mxu0 0.0
    %344 = vmatpush2.msra.mxu0 0.0
    %345 = vmatprep.subr.mxu0 0.0
    %346 = vmatpush2.msra.mxu0 0.0
    %347 = vmatprep.subr.mxu0 0.0
    %348 = vmatpush2.msra.mxu0 0.0
    %349 = vmatprep.subr.mxu0 0.0
    %350 = vmatpush2.msra.mxu0 0.0
    %351 = vmatprep.subr.mxu0 0.0
    %352 = vmatpush2.msra.mxu0 0.0
    %353 = vmatprep.subr.mxu0 0.0
    %354 = vmatpush2.msra.mxu0 0.0
    %355 = vmatprep.subr.mxu0 0.0
    %356 = vmatpush2.msra.mxu0 0.0
    %357 = vmatprep.subr.mxu0 0.0
    %358 = vmatpush2.msra.mxu0 0.0
    %359 = vmatprep.subr.mxu0 0.0
    %360 = vmatpush2.msra.mxu0 0.0
    %361 = vmatprep.subr.mxu0 0.0
    %362 = vmatpush2.msra.mxu0 0.0
    %363 = vmatprep.subr.mxu0 0.0
    %364 = vmatpush2.msra.mxu0 0.0
    %365 = vmatprep.mubr.f32.mxu0 0.0
    %366 = vmatmul.mubr.f32.gmra.mxu0 %v158
    %v367 = vpop.f32.mrf.mxu0
    %v368 = vadd.f32 %v227, %v367
    %v369 = vpop.f32.mrf.mxu0
    %v370 = vadd.f32 %v229, %v369
    %371 = vdwg.mxu0
    %v372 = vxor.u32 %v368, 2147483648
    %v373 = vxor.u32 %v370, 2147483648
    %v374 = vmul.f32 %v372, 1.442695
    %v375 = vpow.pop %v374
    %v376 = vmul.f32 %v373, 1.442695
    %v377 = vpow.pop %v376
    %v378 = vadd.f32 %v375, 1.0
    %v379 = vadd.f32 %v377, 1.0
    %v380 = vrcp.pop %v378
    %v381 = vmul.f32 1.0, %v380
    %v382 = vrcp.pop %v379
    %v383 = vmul.f32 1.0, %v382
    %v384 = vmul.f32 %v383, %v158
    %385 = vmatprep.subr.mxu0 0.0
    %386 = vmatpush1.msra.mxu0 %v109
    %387 = vmatprep.subr.mxu0 0.0
    %388 = vmatpush1.msra.mxu0 %v108
    %389 = vmatprep.subr.mxu0 0.0
    %390 = vmatpush1.msra.mxu0 %v107
    %391 = vmatprep.subr.mxu0 0.0
    %392 = vmatpush1.msra.mxu0 %v106
    %393 = vmatprep.subr.mxu0 0.0
    %394 = vmatpush1.msra.mxu0 %v105
    %395 = vmatprep.subr.mxu0 0.0
    %396 = vmatpush1.msra.mxu0 %v104
    %397 = vmatprep.subr.mxu0 0.0
    %398 = vmatpush1.msra.mxu0 %v103
    %399 = vmatprep.subr.mxu0 0.0
    %400 = vmatpush1.msra.mxu0 %v102
    %401 = vmatprep.subr.mxu0 0.0
    %402 = vmatpush1.msra.mxu0 %v101
    %403 = vmatprep.subr.mxu0 0.0
    %404 = vmatpush1.msra.mxu0 %v100
    %405 = vmatprep.subr.mxu0 0.0
    %406 = vmatpush1.msra.mxu0 %v99
    %407 = vmatprep.subr.mxu0 0.0
    %408 = vmatpush1.msra.mxu0 %v98
    %409 = vmatprep.subr.mxu0 0.0
    %410 = vmatpush1.msra.mxu0 %v97
    %411 = vmatprep.subr.mxu0 0.0
    %412 = vmatpush1.msra.mxu0 %v96
    %413 = vmatprep.subr.mxu0 0.0
    %414 = vmatpush1.msra.mxu0 %v95
    %415 = vmatprep.subr.mxu0 0.0
    %416 = vmatpush1.msra.mxu0 %v94
    %417 = vmatprep.subr.mxu0 0.0
    %418 = vmatpush2.msra.mxu0 0.0
    %419 = vmatprep.subr.mxu0 0.0
    %420 = vmatpush2.msra.mxu0 0.0
    %421 = vmatprep.subr.mxu0 0.0
    %422 = vmatpush2.msra.mxu0 0.0
    %423 = vmatprep.subr.mxu0 0.0
    %424 = vmatpush2.msra.mxu0 0.0
    %425 = vmatprep.subr.mxu0 0.0
    %426 = vmatpush2.msra.mxu0 0.0
    %427 = vmatprep.subr.mxu0 0.0
    %428 = vmatpush2.msra.mxu0 0.0
    %429 = vmatprep.subr.mxu0 0.0
    %430 = vmatpush2.msra.mxu0 0.0
    %431 = vmatprep.subr.mxu0 0.0
    %432 = vmatpush2.msra.mxu0 0.0
    %433 = vmatprep.subr.mxu0 0.0
    %434 = vmatpush2.msra.mxu0 0.0
    %435 = vmatprep.subr.mxu0 0.0
    %436 = vmatpush2.msra.mxu0 0.0
    %437 = vmatprep.subr.mxu0 0.0
    %438 = vmatpush2.msra.mxu0 0.0
    %439 = vmatprep.subr.mxu0 0.0
    %440 = vmatpush2.msra.mxu0 0.0
    %441 = vmatprep.subr.mxu0 0.0
    %442 = vmatpush2.msra.mxu0 0.0
    %443 = vmatprep.subr.mxu0 0.0
    %444 = vmatpush2.msra.mxu0 0.0
    %445 = vmatprep.subr.mxu0 0.0
    %446 = vmatpush2.msra.mxu0 0.0
    %447 = vmatprep.subr.mxu0 0.0
    %448 = vmatpush2.msra.mxu0 0.0
    %449 = vmatprep.mubr.f32.mxu0 0.0
    %450 = vmatmul.mubr.f32.gmra.mxu0 %v384
    %v451 = vpop.f32.mrf.mxu0
    %v452 = vadd.f32 %v298, %v451
    %v453 = vpop.f32.mrf.mxu0
    %454 = vdwg.mxu0
    %v455 = vtanh.pop %v452
    %v456 = vsub.f32 %v455, %v158
    %v457 = vmul.f32 %v381, %v456
    %v458 = vadd.f32 %v158, %v457
    %459 = vst [vmem:[#allocation8] sm:$0xff] %v458
    // Predicated region
    $region34: #{gru_step.1} parent=1 // pred_check
      _
    $region35: #{gru_step.1} parent=1 // pred_check_branch
      %461 = sbr.rel (0) target = $region37
    $region36: #{gru_step.1} parent=1 // pred_region
      %s463 = ssub.s32 128, 128
      %464 = vsyncadd [#allocation4], %s463
      %s466 = sshll.u32 [#allocation8], 4
      %s467 = int_to_ptr.vmem [resolvable:$true] %s466
      %469 = dma.vmem_to_hbm [thread:$0]  %s467, 128, %s5, [#allocation4]
    $region37: #{gru_step.1} parent=1 // pred_fallthru
      _
    // Predicated region
    $region38: #{gru_step.1} parent=1 // pred_check
      _
    $region39: #{gru_step.1} parent=1 // pred_check_branch
      %471 = sbr.rel (0) target = $region41
    $region40: #{gru_step.1} parent=1 // pred_region
      %472 = dma.done [#allocation4], 128
    $region41: #{gru_step.1} parent=1 // pred_fallthru
      _
    %473 = vsyncpa [#allocation3], 1
    %474 = vsyncpa [#allocation6], 1
    %475 = vsyncpa [#allocation4], 1

</llo_original>
